<compile_context>
chip_gen: v5e
topology: v5e:2x2
jax: 0.10.0
libtpu: 0.0.40
codegen_flags: <defaults>
</compile_context>

<pallas_src>
import functools

import jax
import jax.numpy as jnp
from jax.experimental import pallas as pl
from jax.experimental.pallas import tpu as pltpu


def basic_block_kernel(x_ref, w_ref, affine_ref, out_ref, mid_ref, *, H, W, C):
    """One grid step == one batch element (lane-dense layout).

    x_ref     : (1, H+2, W*C)  H-zero-padded input, f32 (W halo is encoded as
                               zero bands inside the weight matrices)
    w_ref     : (6, W*C, W*C)  banded conv weights, bf16
                               rows 0..2 = conv1 ky taps, 3..5 = conv2 ky taps
    affine_ref: (4, W*C)       folded BN params [s1, b1, s2, b2], tiled over W
    out_ref   : (1, H, W*C)    f32 output
    mid_ref   : VMEM scratch (H+2, W*C) f32 for the H-haloed intermediate
    """
    WC = W * C
    x2d = x_ref[0]                                   # (H+2, WC) f32
    x_bf = x2d.astype(jnp.bfloat16)                  # single cast, reused by taps

    # ---- conv1: kx & cin folded into K; one banded matmul per ky tap ----
    acc1 = jnp.dot(x_bf[0:H, :], w_ref[0], preferred_element_type=jnp.float32)
    acc1 += jnp.dot(x_bf[1:H + 1, :], w_ref[1],
                    preferred_element_type=jnp.float32)
    acc1 += jnp.dot(x_bf[2:H + 2, :], w_ref[2],
                    preferred_element_type=jnp.float32)

    # ---- bn1 + relu (f32 epilogue on the VPU) ----
    s1 = affine_ref[0:1, :]
    b1 = affine_ref[1:2, :]
    mid = jnp.maximum(acc1 * s1 + b1, 0.0)           # (H, WC) f32

    # H-halo for conv2: zero only the 2 border rows, write the interior.
    mid_ref[0:1, :] = jnp.zeros((1, WC), jnp.float32)
    mid_ref[H + 1:H + 2, :] = jnp.zeros((1, WC), jnp.float32)
    mid_ref[1:H + 1, :] = mid

    # ---- conv2: banded matmuls (W-halo already encoded as zero bands) ----
    acc2 = jnp.dot(mid_ref[0:H, :].astype(jnp.bfloat16), w_ref[3],
                   preferred_element_type=jnp.float32)
    acc2 += jnp.dot(mid_ref[1:H + 1, :].astype(jnp.bfloat16), w_ref[4],
                    preferred_element_type=jnp.float32)
    acc2 += jnp.dot(mid_ref[2:H + 2, :].astype(jnp.bfloat16), w_ref[5],
                    preferred_element_type=jnp.float32)

    # ---- bn2 + residual + relu (residual slice is lane-aligned, exact f32) ----
    s2 = affine_ref[2:3, :]
    b2 = affine_ref[3:4, :]
    res = x2d[1:H + 1, :]                            # (H, WC) f32
    out_ref[0] = jnp.maximum(acc2 * s2 + b2 + res, 0.0)


def _band_weights(w, width, dtype):
    """Fold the kx taps and input channels of a 3x3 'same' conv into a
    block-banded matrix so the conv along W becomes one matmul per ky tap.

    w: (KH, KW, Cin, Cout) -> (KH, width*Cin, width*Cout) with
    band[ky, p*Cin+i, q*Cout+o] = w[ky, kx, i, o]  where p == q + kx - 1.
    Taps that would read outside [0, width) get no band -> encodes the
    zero padding along W directly in the weights.
    """
    KH, KW, Cin, Cout = w.shape
    p = jnp.arange(width)
    q = jnp.arange(width)
    kx = jnp.arange(KW)
    sel = (p[None, :, None] == (q[None, None, :] + kx[:, None, None] - 1))
    band = jnp.einsum('kxio,xpq->kpiqo', w, sel.astype(w.dtype))
    return band.reshape(KH, width * Cin, width * Cout).astype(dtype)


def basic_block_pallas(x_nchw, w1, w2, s1, b1, s2, b2):
    """x_nchw: (N, C, H, W) float32.  Returns (N, C, H, W) float32."""
    N, C, H, W = x_nchw.shape
    assert w1.shape[-1] == C and w2.shape[-1] == C, \
        "downsample=None requires inplanes == planes"
    WC = W * C

    # NHWC, zero-pad only H, flatten W & C into the lane dim -> (H+2, W*C).
    x = jnp.transpose(x_nchw, (0, 2, 3, 1))
    xpad = jnp.pad(x, ((0, 0), (1, 1), (0, 0), (0, 0)))
    xpad2d = xpad.reshape(N, H + 2, WC)

    # Banded bf16 weights for both convs stacked into one slab.
    bw = jnp.concatenate(
        [_band_weights(w1, W, jnp.bfloat16),
         _band_weights(w2, W, jnp.bfloat16)], axis=0)          # (6, WC, WC)

    # Folded BN scale/bias tiled to the lane layout (index = w*C + c).
    affine = jnp.stack([jnp.tile(s1, W), jnp.tile(b1, W),
                        jnp.tile(s2, W), jnp.tile(b2, W)])      # (4, WC) f32

    kernel = functools.partial(basic_block_kernel, H=H, W=W, C=C)

    grid_spec = pltpu.PrefetchScalarGridSpec(
        num_scalar_prefetch=0,
        grid=(N,),
        in_specs=[
            pl.BlockSpec((1, H + 2, WC), lambda b: (b, 0, 0)),
            pl.BlockSpec((6, WC, WC), lambda b: (0, 0, 0)),
            pl.BlockSpec((4, WC), lambda b: (0, 0)),
        ],
        out_specs=pl.BlockSpec((1, H, WC), lambda b: (b, 0, 0)),
        scratch_shapes=[pltpu.VMEM((H + 2, WC), jnp.float32)],
    )

    out_flat = pl.pallas_call(
        kernel,
        out_shape=jax.ShapeDtypeStruct((N, H, WC), jnp.float32),
        grid_spec=grid_spec,
        compiler_params=pltpu.CompilerParams(
            dimension_semantics=("parallel",)),
    )(xpad2d, bw, affine)

    out_nhwc = out_flat.reshape(N, H, W, C)
    return jnp.transpose(out_nhwc, (0, 3, 1, 2))     # back to NCHW


def basic_block_ref(x_nchw, w1, w2, s1, b1, s2, b2):
    """Pure-JAX f32 reference (module semantics) for the correctness check."""
    x = jnp.transpose(x_nchw, (0, 2, 3, 1))

    def conv(inp, w):
        return jax.lax.conv_general_dilated(
            inp, w, window_strides=(1, 1), padding=((1, 1), (1, 1)),
            dimension_numbers=("NHWC", "HWIO", "NHWC"))

    out = conv(x, w1) * s1 + b1
    out = jnp.maximum(out, 0.0)
    out = conv(out, w2) * s2 + b2
    out = out + x
    out = jnp.maximum(out, 0.0)
    return jnp.transpose(out, (0, 3, 1, 2))


if __name__ == "__main__":
    # BasicBlock(inplanes=8, planes=8, stride=1, dilation=1, downsample=None)
    # W * C = 16 * 8 = 128  ->  lane-dense last dim.
    N, C, H, W = 2, 8, 16, 16
    key = jax.random.PRNGKey(0)
    k = jax.random.split(key, 10)

    x = jax.random.normal(k[0], (N, C, H, W), jnp.float32)

    # conv weights (HWIO), bias=False as in the module
    w1 = 0.1 * jax.random.normal(k[1], (3, 3, C, C), jnp.float32)
    w2 = 0.1 * jax.random.normal(k[2], (3, 3, C, C), jnp.float32)

    # eval-mode BatchNorm, folded to per-channel scale/bias
    eps = 1e-5
    g1 = 1.0 + 0.1 * jax.random.normal(k[3], (C,), jnp.float32)
    be1 = 0.1 * jax.random.normal(k[4], (C,), jnp.float32)
    rm1 = 0.1 * jax.random.normal(k[5], (C,), jnp.float32)
    rv1 = 1.0 + 0.1 * jnp.abs(jax.random.normal(k[6], (C,), jnp.float32))
    g2 = 1.0 + 0.1 * jax.random.normal(k[7], (C,), jnp.float32)
    be2 = 0.1 * jax.random.normal(k[8], (C,), jnp.float32)
    rm2 = 0.1 * jax.random.normal(k[9], (C,), jnp.float32)
    rv2 = 1.0 + 0.1 * jnp.abs(jax.random.normal(key, (C,), jnp.float32))

    s1 = g1 / jnp.sqrt(rv1 + eps)
    b1 = be1 - rm1 * s1
    s2 = g2 / jnp.sqrt(rv2 + eps)
    b2 = be2 - rm2 * s2

    out = jax.block_until_ready(
        jax.jit(basic_block_pallas)(x, w1, w2, s1, b1, s2, b2))
    ref = jax.block_until_ready(basic_block_ref(x, w1, w2, s1, b1, s2, b2))

    assert out.shape == (N, C, H, W)
    # Tolerance accounts for bf16 MXU inputs (f32 accumulation); BN/residual
    # epilogue is exact f32.
    assert jnp.allclose(out, ref, rtol=5e-2, atol=5e-2), \
        float(jnp.max(jnp.abs(out - ref)))
    print("KERNEL_OK")
</pallas_src>

<mosaic_0001>
module attributes {stable_mosaic.version = 11 : i64} {
  func.func @basic_block_kernel(%arg0: i32, %arg1: memref<1x18x128xf32, #tpu.memory_space<vmem>>, %arg2: memref<6x128x128xbf16, #tpu.memory_space<vmem>>, %arg3: memref<4x128xf32, #tpu.memory_space<vmem>>, %arg4: memref<1x16x128xf32, #tpu.memory_space<vmem>>, %arg5: memref<18x128xf32, #tpu.memory_space<vmem>>) attributes {dimension_semantics = [#tpu.dimension_semantics<parallel>], iteration_bounds = array<i64: 2>, scalar_prefetch = 0 : i64, scratch_operands = 1 : i64, tpu.core_type = #tpu.core_type<tc>, window_params = [{transform_indices = @transform_0, window_bounds = array<i64: 1, 18, 128>}, {pipeline_mode = #tpu.pipeline_mode<synchronous>, transform_indices = @transform_1, window_bounds = array<i64: 6, 128, 128>}, {pipeline_mode = #tpu.pipeline_mode<synchronous>, transform_indices = @transform_2, window_bounds = array<i64: 4, 128>}, {transform_indices = @transform_3, window_bounds = array<i64: 1, 16, 128>}]} {
    %c0 = arith.constant 0 : index
    %c0_0 = arith.constant 0 : index
    %c0_1 = arith.constant 0 : index
    %0 = vector.load %arg1[%c0, %c0_0, %c0_1] : memref<1x18x128xf32, #tpu.memory_space<vmem>>, vector<1x18x128xf32>
    %1 = vector.shape_cast %0 : vector<1x18x128xf32> to vector<18x128xf32>
    %2 = arith.truncf %1 : vector<18x128xf32> to vector<18x128xbf16>
    %3 = vector.extract_strided_slice %2 {offsets = [0, 0], sizes = [16, 128], strides = [1, 1]} : vector<18x128xbf16> to vector<16x128xbf16>
    %c0_2 = arith.constant 0 : index
    %c0_3 = arith.constant 0 : index
    %c0_4 = arith.constant 0 : index
    %4 = vector.load %arg2[%c0_2, %c0_3, %c0_4] : memref<6x128x128xbf16, #tpu.memory_space<vmem>>, vector<1x128x128xbf16>
    %5 = vector.shape_cast %4 : vector<1x128x128xbf16> to vector<128x128xbf16>
    %cst = arith.constant dense<0.000000e+00> : vector<16x128xf32>
    %6 = tpu.matmul %3, %5, %cst {dimension_numbers = #tpu.dot_dimension_numbers<[1], [0], [0], [1], [0, 0, 1, 1], [], []>} : vector<16x128xbf16>, vector<128x128xbf16>, vector<16x128xf32> -> vector<16x128xf32>
    %7 = vector.extract_strided_slice %2 {offsets = [1, 0], sizes = [16, 128], strides = [1, 1]} : vector<18x128xbf16> to vector<16x128xbf16>
    %c1 = arith.constant 1 : index
    %c0_5 = arith.constant 0 : index
    %c0_6 = arith.constant 0 : index
    %8 = vector.load %arg2[%c1, %c0_5, %c0_6] : memref<6x128x128xbf16, #tpu.memory_space<vmem>>, vector<1x128x128xbf16>
    %9 = vector.shape_cast %8 : vector<1x128x128xbf16> to vector<128x128xbf16>
    %cst_7 = arith.constant dense<0.000000e+00> : vector<16x128xf32>
    %10 = tpu.matmul %7, %9, %cst_7 {dimension_numbers = #tpu.dot_dimension_numbers<[1], [0], [0], [1], [0, 0, 1, 1], [], []>} : vector<16x128xbf16>, vector<128x128xbf16>, vector<16x128xf32> -> vector<16x128xf32>
    %11 = arith.addf %6, %10 : vector<16x128xf32>
    %12 = vector.extract_strided_slice %2 {offsets = [2, 0], sizes = [16, 128], strides = [1, 1]} : vector<18x128xbf16> to vector<16x128xbf16>
    %c2 = arith.constant 2 : index
    %c0_8 = arith.constant 0 : index
    %c0_9 = arith.constant 0 : index
    %13 = vector.load %arg2[%c2, %c0_8, %c0_9] : memref<6x128x128xbf16, #tpu.memory_space<vmem>>, vector<1x128x128xbf16>
    %14 = vector.shape_cast %13 : vector<1x128x128xbf16> to vector<128x128xbf16>
    %cst_10 = arith.constant dense<0.000000e+00> : vector<16x128xf32>
    %15 = tpu.matmul %12, %14, %cst_10 {dimension_numbers = #tpu.dot_dimension_numbers<[1], [0], [0], [1], [0, 0, 1, 1], [], []>} : vector<16x128xbf16>, vector<128x128xbf16>, vector<16x128xf32> -> vector<16x128xf32>
    %16 = arith.addf %11, %15 : vector<16x128xf32>
    %c0_11 = arith.constant 0 : index
    %c0_12 = arith.constant 0 : index
    %17 = vector.load %arg3[%c0_11, %c0_12] : memref<4x128xf32, #tpu.memory_space<vmem>>, vector<1x128xf32>
    %c1_13 = arith.constant 1 : index
    %c0_14 = arith.constant 0 : index
    %18 = vector.load %arg3[%c1_13, %c0_14] : memref<4x128xf32, #tpu.memory_space<vmem>>, vector<1x128xf32>
    %19 = vector.broadcast %17 : vector<1x128xf32> to vector<16x128xf32>
    %20 = arith.mulf %16, %19 : vector<16x128xf32>
    %21 = vector.broadcast %18 : vector<1x128xf32> to vector<16x128xf32>
    %22 = arith.addf %20, %21 : vector<16x128xf32>
    %cst_15 = arith.constant 0.000000e+00 : f32
    %23 = vector.broadcast %cst_15 : f32 to vector<16x128xf32>
    %24 = arith.maximumf %22, %23 : vector<16x128xf32>
    %cst_16 = arith.constant 0.000000e+00 : f32
    %25 = vector.broadcast %cst_16 : f32 to vector<1x128xf32>
    %c0_17 = arith.constant 0 : index
    %c0_18 = arith.constant 0 : index
    %26 = vector.load %arg5[%c0_17, %c0_18] : memref<18x128xf32, #tpu.memory_space<vmem>>, vector<1x128xf32>
    tpu.vector_store %arg5[%c0_17, %c0_18], %25 {strides = array<i32>} : memref<18x128xf32, #tpu.memory_space<vmem>>, vector<1x128xf32>,
    %cst_19 = arith.constant 0.000000e+00 : f32
    %27 = vector.broadcast %cst_19 : f32 to vector<1x128xf32>
    %c17 = arith.constant 17 : index
    %c0_20 = arith.constant 0 : index
    %28 = vector.load %arg5[%c17, %c0_20] : memref<18x128xf32, #tpu.memory_space<vmem>>, vector<1x128xf32>
    tpu.vector_store %arg5[%c17, %c0_20], %27 {strides = array<i32>} : memref<18x128xf32, #tpu.memory_space<vmem>>, vector<1x128xf32>,
    %c1_21 = arith.constant 1 : index
    %c0_22 = arith.constant 0 : index
    %29 = vector.load %arg5[%c1_21, %c0_22] : memref<18x128xf32, #tpu.memory_space<vmem>>, vector<16x128xf32>
    tpu.vector_store %arg5[%c1_21, %c0_22], %24 {strides = array<i32>} : memref<18x128xf32, #tpu.memory_space<vmem>>, vector<16x128xf32>,
    %c0_23 = arith.constant 0 : index
    %c0_24 = arith.constant 0 : index
    %30 = vector.load %arg5[%c0_23, %c0_24] : memref<18x128xf32, #tpu.memory_space<vmem>>, vector<16x128xf32>
    %31 = arith.truncf %30 : vector<16x128xf32> to vector<16x128xbf16>
    %c3 = arith.constant 3 : index
    %c0_25 = arith.constant 0 : index
    %c0_26 = arith.constant 0 : index
    %32 = vector.load %arg2[%c3, %c0_25, %c0_26] : memref<6x128x128xbf16, #tpu.memory_space<vmem>>, vector<1x128x128xbf16>
    %33 = vector.shape_cast %32 : vector<1x128x128xbf16> to vector<128x128xbf16>
    %cst_27 = arith.constant dense<0.000000e+00> : vector<16x128xf32>
    %34 = tpu.matmul %31, %33, %cst_27 {dimension_numbers = #tpu.dot_dimension_numbers<[1], [0], [0], [1], [0, 0, 1, 1], [], []>} : vector<16x128xbf16>, vector<128x128xbf16>, vector<16x128xf32> -> vector<16x128xf32>
    %c1_28 = arith.constant 1 : index
    %c0_29 = arith.constant 0 : index
    %35 = vector.load %arg5[%c1_28, %c0_29] : memref<18x128xf32, #tpu.memory_space<vmem>>, vector<16x128xf32>
    %36 = arith.truncf %35 : vector<16x128xf32> to vector<16x128xbf16>
    %c4 = arith.constant 4 : index
    %c0_30 = arith.constant 0 : index
    %c0_31 = arith.constant 0 : index
    %37 = vector.load %arg2[%c4, %c0_30, %c0_31] : memref<6x128x128xbf16, #tpu.memory_space<vmem>>, vector<1x128x128xbf16>
    %38 = vector.shape_cast %37 : vector<1x128x128xbf16> to vector<128x128xbf16>
    %cst_32 = arith.constant dense<0.000000e+00> : vector<16x128xf32>
    %39 = tpu.matmul %36, %38, %cst_32 {dimension_numbers = #tpu.dot_dimension_numbers<[1], [0], [0], [1], [0, 0, 1, 1], [], []>} : vector<16x128xbf16>, vector<128x128xbf16>, vector<16x128xf32> -> vector<16x128xf32>
    %40 = arith.addf %34, %39 : vector<16x128xf32>
    %c2_33 = arith.constant 2 : index
    %c0_34 = arith.constant 0 : index
    %41 = vector.load %arg5[%c2_33, %c0_34] : memref<18x128xf32, #tpu.memory_space<vmem>>, vector<16x128xf32>
    %42 = arith.truncf %41 : vector<16x128xf32> to vector<16x128xbf16>
    %c5 = arith.constant 5 : index
    %c0_35 = arith.constant 0 : index
    %c0_36 = arith.constant 0 : index
    %43 = vector.load %arg2[%c5, %c0_35, %c0_36] : memref<6x128x128xbf16, #tpu.memory_space<vmem>>, vector<1x128x128xbf16>
    %44 = vector.shape_cast %43 : vector<1x128x128xbf16> to vector<128x128xbf16>
    %cst_37 = arith.constant dense<0.000000e+00> : vector<16x128xf32>
    %45 = tpu.matmul %42, %44, %cst_37 {dimension_numbers = #tpu.dot_dimension_numbers<[1], [0], [0], [1], [0, 0, 1, 1], [], []>} : vector<16x128xbf16>, vector<128x128xbf16>, vector<16x128xf32> -> vector<16x128xf32>
    %46 = arith.addf %40, %45 : vector<16x128xf32>
    %c2_38 = arith.constant 2 : index
    %c0_39 = arith.constant 0 : index
    %47 = vector.load %arg3[%c2_38, %c0_39] : memref<4x128xf32, #tpu.memory_space<vmem>>, vector<1x128xf32>
    %c3_40 = arith.constant 3 : index
    %c0_41 = arith.constant 0 : index
    %48 = vector.load %arg3[%c3_40, %c0_41] : memref<4x128xf32, #tpu.memory_space<vmem>>, vector<1x128xf32>
    %49 = vector.extract_strided_slice %1 {offsets = [1, 0], sizes = [16, 128], strides = [1, 1]} : vector<18x128xf32> to vector<16x128xf32>
    %50 = vector.broadcast %47 : vector<1x128xf32> to vector<16x128xf32>
    %51 = arith.mulf %46, %50 : vector<16x128xf32>
    %52 = vector.broadcast %48 : vector<1x128xf32> to vector<16x128xf32>
    %53 = arith.addf %51, %52 : vector<16x128xf32>
    %54 = arith.addf %53, %49 : vector<16x128xf32>
    %cst_42 = arith.constant 0.000000e+00 : f32
    %55 = vector.broadcast %cst_42 : f32 to vector<16x128xf32>
    %56 = arith.maximumf %54, %55 : vector<16x128xf32>
    %c0_43 = arith.constant 0 : index
    %c0_44 = arith.constant 0 : index
    %c0_45 = arith.constant 0 : index
    %57 = vector.load %arg4[%c0_43, %c0_44, %c0_45] : memref<1x16x128xf32, #tpu.memory_space<vmem>>, vector<1x16x128xf32>
    %58 = vector.shape_cast %57 : vector<1x16x128xf32> to vector<16x128xf32>
    %59 = vector.shape_cast %56 : vector<16x128xf32> to vector<1x16x128xf32>
    tpu.vector_store %arg4[%c0_43, %c0_44, %c0_45], %59 {strides = array<i32>} : memref<1x16x128xf32, #tpu.memory_space<vmem>>, vector<1x16x128xf32>,
    return
  }
  func.func @transform_0(%arg0: i32) -> (i32, i32, i32) {
    %c0_i32 = arith.constant 0 : i32
    %c0_i32_0 = arith.constant 0 : i32
    %c0_i32_1 = arith.constant 0 : i32
    return %arg0, %c0_i32, %c0_i32_0 : i32, i32, i32
  }
  func.func @transform_1(%arg0: i32) -> (i32, i32, i32) {
    %c0_i32 = arith.constant 0 : i32
    %c0_i32_0 = arith.constant 0 : i32
    %c0_i32_1 = arith.constant 0 : i32
    %c0_i32_2 = arith.constant 0 : i32
    return %c0_i32, %c0_i32_0, %c0_i32_1 : i32, i32, i32
  }
  func.func @transform_2(%arg0: i32) -> (i32, i32) {
    %c0_i32 = arith.constant 0 : i32
    %c0_i32_0 = arith.constant 0 : i32
    %c0_i32_1 = arith.constant 0 : i32
    return %c0_i32, %c0_i32_0 : i32, i32
  }
  func.func @transform_3(%arg0: i32) -> (i32, i32, i32) {
    %c0_i32 = arith.constant 0 : i32
    %c0_i32_0 = arith.constant 0 : i32
    %c0_i32_1 = arith.constant 0 : i32
    return %arg0, %c0_i32, %c0_i32_0 : i32, i32, i32
  }
}

</mosaic_0001>

<llo_original>
// kernel: tile.23
$region0: #{tile.23}
  #allocation0 [shape = 's32[1]{0}', space=sflag, size = 0x4, scoped, tag = 'scoped memory for tile.23']
  %s0 = inlined_call_operand.vmem [shape: f32[8], index: 0, kind: input, shape index: {}]
  %s1 = inlined_call_operand.vmem [shape: f32[16,8], index: 1, kind: output, shape index: {}]
  // Predicated region
  $region2: #{tile.23} parent=0 // pred_check
    _
  $region3: #{tile.23} parent=0 // pred_check_branch
    %3 = sbr.rel (0) target = $region5
  $region4: #{tile.23} parent=0 // pred_region
    _
  $region5: #{tile.23} parent=0 // pred_fallthru
    _
  %v4 = vld [vmem:[%s0] ss:$0 sm:$0xff]
  %5 = vst [vmem:[%s1] sm:$0xff] %v4
  %s6 = scalar_lea.vmem %s1, 8
  %7 = vst [vmem:[%s6] sm:$0xff] %v4

// kernel: tile.36
$region0: #{tile.36}
  %s0 = inlined_call_operand.vmem [shape: f32[16,8], index: 0, kind: input, shape index: {}]
  %s1 = inlined_call_operand.vmem [shape: f32[1,128], index: 1, kind: output, shape index: {}]
  $region1: #{tile.36} parent=0
    #allocation0 [shape = 'u8[4096]{0}', space=vmem, size = 0x1000, scoped, tag = 'scoped mem for output reshape']
    %v2 = vld [vmem:[%s0] sm:$0x1]
    %vm3 = vcmask 64512
    %4 = vst.msk [vmem:[#allocation0] sm:$0x1] %vm3, %v2
    %s5 = scalar_lea.vmem %s0, 15
    %v6 = vld [vmem:[%s5] sm:$0x1]
    %7 = vrot.lane.b32.xlu0 %v6, 120
    %v8 = vpop.permute.xlu0 %7
    %vm9 = vcmask 1048512
    %10 = vst.msk [vmem:[#allocation0] sm:$0x1] %vm9, %v8
    %s11 = scalar_lea.vmem %s0, 14
    %v12 = vld [vmem:[%s11] sm:$0x1]
    %13 = vrot.lane.b32.xlu0 %v12, 112
    %v14 = vpop.permute.xlu0 %13
    %vm15 = vcmask 982912
    %16 = vst.msk [vmem:[#allocation0] sm:$0x1] %vm15, %v14
    %s17 = scalar_lea.vmem %s0, 13
    %v18 = vld [vmem:[%s17] sm:$0x1]
    %19 = vrot.lane.b32.xlu0 %v18, 104
    %v20 = vpop.permute.xlu0 %19
    %vm21 = vcmask 917312
    %22 = vst.msk [vmem:[#allocation0] sm:$0x1] %vm21, %v20
    %s23 = scalar_lea.vmem %s0, 12
    %v24 = vld [vmem:[%s23] sm:$0x1]
    %25 = vrot.lane.b32.xlu0 %v24, 96
    %v26 = vpop.permute.xlu0 %25
    %vm27 = vcmask 851712
    %28 = vst.msk [vmem:[#allocation0] sm:$0x1] %vm27, %v26
    %s29 = scalar_lea.vmem %s0, 11
    %v30 = vld [vmem:[%s29] sm:$0x1]
    %31 = vrot.lane.b32.xlu0 %v30, 88
    %v32 = vpop.permute.xlu0 %31
    %vm33 = vcmask 786112
    %34 = vst.msk [vmem:[#allocation0] sm:$0x1] %vm33, %v32
    %s35 = scalar_lea.vmem %s0, 10
    %v36 = vld [vmem:[%s35] sm:$0x1]
    %37 = vrot.lane.b32.xlu0 %v36, 80
    %v38 = vpop.permute.xlu0 %37
    %vm39 = vcmask 720512
    %40 = vst.msk [vmem:[#allocation0] sm:$0x1] %vm39, %v38
    %s41 = scalar_lea.vmem %s0, 9
    %v42 = vld [vmem:[%s41] sm:$0x1]
    %43 = vrot.lane.b32.xlu0 %v42, 72
    %v44 = vpop.permute.xlu0 %43
    %vm45 = vcmask 654912
    %46 = vst.msk [vmem:[#allocation0] sm:$0x1] %vm45, %v44
    %s47 = scalar_lea.vmem %s0, 8
    %v48 = vld [vmem:[%s47] sm:$0x1]
    %49 = vrot.lane.b32.xlu0 %v48, 64
    %v50 = vpop.permute.xlu0 %49
    %vm51 = vcmask 589312
    %52 = vst.msk [vmem:[#allocation0] sm:$0x1] %vm51, %v50
    %s53 = scalar_lea.vmem %s0, 7
    %v54 = vld [vmem:[%s53] sm:$0x1]
    %55 = vrot.lane.b32.xlu0 %v54, 56
    %v56 = vpop.permute.xlu0 %55
    %vm57 = vcmask 523712
    %58 = vst.msk [vmem:[#allocation0] sm:$0x1] %vm57, %v56
    %s59 = scalar_lea.vmem %s0, 6
    %v60 = vld [vmem:[%s59] sm:$0x1]
    %61 = vrot.lane.b32.xlu0 %v60, 48
    %v62 = vpop.permute.xlu0 %61
    %vm63 = vcmask 458112
    %64 = vst.msk [vmem:[#allocation0] sm:$0x1] %vm63, %v62
    %s65 = scalar_lea.vmem %s0, 5
    %v66 = vld [vmem:[%s65] sm:$0x1]
    %67 = vrot.lane.b32.xlu0 %v66, 40
    %v68 = vpop.permute.xlu0 %67
    %vm69 = vcmask 392512
    %70 = vst.msk [vmem:[#allocation0] sm:$0x1] %vm69, %v68
    %s71 = scalar_lea.vmem %s0, 4
    %v72 = vld [vmem:[%s71] sm:$0x1]
    %73 = vrot.lane.b32.xlu0 %v72, 32
    %v74 = vpop.permute.xlu0 %73
    %vm75 = vcmask 326912
    %76 = vst.msk [vmem:[#allocation0] sm:$0x1] %vm75, %v74
    %s77 = scalar_lea.vmem %s0, 3
    %v78 = vld [vmem:[%s77] sm:$0x1]
    %79 = vrot.lane.b32.xlu0 %v78, 24
    %v80 = vpop.permute.xlu0 %79
    %vm81 = vcmask 261312
    %82 = vst.msk [vmem:[#allocation0] sm:$0x1] %vm81, %v80
    %s83 = scalar_lea.vmem %s0, 2
    %v84 = vld [vmem:[%s83] sm:$0x1]
    %85 = vrot.lane.b32.xlu0 %v84, 16
    %v86 = vpop.permute.xlu0 %85
    %vm87 = vcmask 195712
    %88 = vst.msk [vmem:[#allocation0] sm:$0x1] %vm87, %v86
    %s89 = scalar_lea.vmem %s0, 1
    %v90 = vld [vmem:[%s89] sm:$0x1]
    %91 = vrot.lane.b32.xlu0 %v90, 8
    %v92 = vpop.permute.xlu0 %91
    %vm93 = vcmask 130112
    %94 = vst.msk [vmem:[#allocation0] sm:$0x1] %vm93, %v92
    %s96 = ssub.s32 2, 1
    %v97 = vld [vmem:[#allocation0] sm:%s96]
    %s99 = ssub.s32 2, 1
    %100 = vst [vmem:[%s1] sm:%s99] %v97

// kernel: basic_block_pallas.1
$region0: #{basic_block_pallas.1}
  #allocation0 [shape = 'u32[]', space=smem, size = 0x4, offset = 0x4, fixed_abs, tag = 'smem constant byte address 0x4 - core index']
  #allocation1 [shape = 'u32[72,128]{1,0:T(1,128)}', space=vmem, size = 0x9000, scoped, tag = 'internal scratch']
  #allocation2 [shape = 'f32[18,128]{1,0:T(8,128)}', space=vmem, size = 0x3000, scoped, tag = 'scratch operand']
  %s0 = inlined_call_operand.vmem [shape: f32[2,18,128], index: 0, kind: input, shape index: {}]
  %s1 = inlined_call_operand.vmem [shape: bf16[6,128,128], index: 1, kind: input, shape index: {}]
  %s2 = inlined_call_operand.vmem [shape: f32[4,128], index: 2, kind: input, shape index: {}]
  %s3 = inlined_call_operand.vmem [shape: f32[2,16,128], index: 3, kind: output, shape index: {}]
  %s4 = sld [smem:[#allocation0]]
  $region45: #{basic_block_pallas.1} parent=0
    _
  %s6 = ssub.s32 1, %s4
  %s7 = scalar_select 0, %s6, %s4
  loop: start=0, step=1, limit=4
  $region2: #{basic_block_pallas.1} parent=0 // loop_pre_header
    _
  $region3: #{basic_block_pallas.1} parent=0 // loop_header
    %s9 = sphi 0, %s13
    %p10 = scmp.ge.s32.totalorder %s9, 4
    %s19 = sphi 0, %s21
    %s22 = sphi 0, %s19
    %s23 = sphi 0, %s22
    %s39 = sphi 0, %s23
    %s43 = sphi 0, %s43
    %s45 = sphi 0, %s43
    %s46 = sphi 0, %s45
    %s60 = sphi 0, %s46
    %s64 = sphi 0, %s64
    %s66 = sphi 0, %s64
    %s67 = sphi 0, %s66
    %s81 = sphi 0, %s67
    %s87 = sphi 0, %s89
    %s90 = sphi 0, %s87
    %s91 = sphi 0, %s90
    %s107 = sphi 0, %s91
  $region4: #{basic_block_pallas.1} parent=0 // loop_header_branch
    %12 = sbr.rel (%p10) target = $region8
  $region5: #{basic_block_pallas.1} parent=0 // loop_body
    %s14 = ssub.s32 %s9, 1
    %s15 = ssub.s32 %s9, 2
    %s16 = sadd.s32 %s9, 1
    %s17 = ssub.s32 %s9, %s16
    %p18 = scmp.eq.s32.totalorder %s17, 0
    %s20 = sadd.s32 %s19, 1
    %s21 = scalar_select %p18, %s19, %s20
    %p24 = pneg %p18
    %p25 = scmp.eq.s32.totalorder %s9, 1
    %p26 = por %p24, %p25
    %p27 = scmp.ne.s32.totalorder %s19, %s22
    %p28 = scmp.eq.s32.totalorder %s9, 0
    %p29 = por %p27, %p28
    %p30 = scmp.ne.s32.totalorder %s19, %s22
    %p31 = scmp.eq.s32.totalorder %s14, 1
    %p32 = por %p30, %p31
    %p33 = scmp.ne.s32.totalorder %s22, %s23
    %p34 = scmp.eq.s32.totalorder %s14, 0
    %p35 = por %p33, %p34
    %p36 = scmp.ne.s32.totalorder %s22, %s23
    %p37 = scmp.eq.s32.totalorder %s15, 1
    %p38 = por %p36, %p37
    %p40 = scmp.ne.s32.totalorder %s23, %s39
    %p41 = scmp.eq.s32.totalorder %s15, 0
    %p42 = por %p40, %p41
    %s44 = sadd.s32 %s43, 1
    %p47 = scmp.eq.s32.totalorder %s9, 1
    %p48 = scmp.ne.s32.totalorder %s43, %s45
    %p49 = scmp.eq.s32.totalorder %s9, 0
    %p50 = por %p48, %p49
    %p51 = scmp.ne.s32.totalorder %s43, %s45
    %p52 = scmp.eq.s32.totalorder %s14, 1
    %p53 = por %p51, %p52
    %p54 = scmp.ne.s32.totalorder %s45, %s46
    %p55 = scmp.eq.s32.totalorder %s14, 0
    %p56 = por %p54, %p55
    %p57 = scmp.ne.s32.totalorder %s45, %s46
    %p58 = scmp.eq.s32.totalorder %s15, 1
    %p59 = por %p57, %p58
    %p61 = scmp.ne.s32.totalorder %s46, %s60
    %p62 = scmp.eq.s32.totalorder %s15, 0
    %p63 = por %p61, %p62
    %s65 = sadd.s32 %s64, 1
    %p68 = scmp.eq.s32.totalorder %s9, 1
    %p69 = scmp.ne.s32.totalorder %s64, %s66
    %p70 = scmp.eq.s32.totalorder %s9, 0
    %p71 = por %p69, %p70
    %p72 = scmp.ne.s32.totalorder %s64, %s66
    %p73 = scmp.eq.s32.totalorder %s14, 1
    %p74 = por %p72, %p73
    %p75 = scmp.ne.s32.totalorder %s66, %s67
    %p76 = scmp.eq.s32.totalorder %s14, 0
    %p77 = por %p75, %p76
    %p78 = scmp.ne.s32.totalorder %s66, %s67
    %p79 = scmp.eq.s32.totalorder %s15, 1
    %p80 = por %p78, %p79
    %p82 = scmp.ne.s32.totalorder %s67, %s81
    %p83 = scmp.eq.s32.totalorder %s15, 0
    %p84 = por %p82, %p83
    %s85 = ssub.s32 %s9, %s16
    %p86 = scmp.eq.s32.totalorder %s85, 0
    %s88 = sadd.s32 %s87, 1
    %s89 = scalar_select %p86, %s87, %s88
    %p92 = pneg %p86
    %p93 = scmp.eq.s32.totalorder %s9, 1
    %p94 = por %p92, %p93
    %p95 = scmp.ne.s32.totalorder %s87, %s90
    %p96 = scmp.eq.s32.totalorder %s9, 0
    %p97 = por %p95, %p96
    %p98 = scmp.ne.s32.totalorder %s87, %s90
    %p99 = scmp.eq.s32.totalorder %s14, 1
    %p100 = por %p98, %p99
    %p101 = scmp.ne.s32.totalorder %s90, %s91
    %p102 = scmp.eq.s32.totalorder %s14, 0
    %p103 = por %p101, %p102
    %p104 = scmp.ne.s32.totalorder %s90, %s91
    %p105 = scmp.eq.s32.totalorder %s15, 1
    %p106 = por %p104, %p105
    %p108 = scmp.ne.s32.totalorder %s91, %s107
    %p109 = scmp.eq.s32.totalorder %s15, 0
    %p110 = por %p108, %p109
    %p111 = scmp.le.s32.totalorder 1, %s9
    %p112 = scmp.lt.s32.totalorder %s9, 3
    %p113 = pnand %p111, %p112
    %p114 = pneg %p113
    // Predicated region
    $region9: #{basic_block_pallas.1} parent=5 // pred_check
      _
    $region10: #{basic_block_pallas.1} parent=5 // pred_check_branch
      %116 = sbr.rel (%p113) target = $region12
    $region11: #{basic_block_pallas.1} parent=5 // pred_region
      %s117 = ssub.s32 %s9, 1
      // Predicated region
      $region13: #{basic_block_pallas.1} parent=11 // pred_check
        %p118 = pneg %p56
      $region14: #{basic_block_pallas.1} parent=11 // pred_check_branch
        %120 = sbr.rel (%p118) target = $region16
      $region15: #{basic_block_pallas.1} parent=11 // pred_region
        _
      $region16: #{basic_block_pallas.1} parent=11 // pred_fallthru
        _
      // Predicated region
      $region17: #{basic_block_pallas.1} parent=11 // pred_check
        %p121 = pneg %p77
      $region18: #{basic_block_pallas.1} parent=11 // pred_check_branch
        %123 = sbr.rel (%p121) target = $region20
      $region19: #{basic_block_pallas.1} parent=11 // pred_region
        _
      $region20: #{basic_block_pallas.1} parent=11 // pred_fallthru
        _
    $region12: #{basic_block_pallas.1} parent=5 // pred_fallthru
      _
    %p124 = scmp.lt.s32.totalorder %s9, 2
    // Predicated region
    $region21: #{basic_block_pallas.1} parent=5 // pred_check
      %p125 = pneg %p124
    $region22: #{basic_block_pallas.1} parent=5 // pred_check_branch
      %127 = sbr.rel (%p125) target = $region24
    $region23: #{basic_block_pallas.1} parent=5 // pred_region
      // Predicated region
      $region25: #{basic_block_pallas.1} parent=23 // pred_check
        %p128 = pneg %p29
      $region26: #{basic_block_pallas.1} parent=23 // pred_check_branch
        %130 = sbr.rel (%p128) target = $region28
      $region27: #{basic_block_pallas.1} parent=23 // pred_region
        %p131 = scmp.lt.s32.totalorder %s9, 1
        %s132 = scalar_select %p131, %s9, 1
        %s133 = smul.addr %s132, 3
        %s134 = smul.addr %s133, 8
        %s135 = scalar_lea.vmem %s0, %s134
      $region28: #{basic_block_pallas.1} parent=23 // pred_fallthru
        _
    $region24: #{basic_block_pallas.1} parent=5 // pred_fallthru
      _
    %p136 = scmp.le.s32.totalorder 1, %s9
    %p137 = scmp.lt.s32.totalorder %s9, 3
    %p138 = pnand %p136, %p137
    %p139 = pneg %p138
    // Predicated region
    $region29: #{basic_block_pallas.1} parent=5 // pred_check
      _
    $region30: #{basic_block_pallas.1} parent=5 // pred_check_branch
      %141 = sbr.rel (%p138) target = $region32
    $region31: #{basic_block_pallas.1} parent=5 // pred_region
      %s142 = ssub.s32 %s9, 1
      %p143 = scmp.lt.s32.totalorder %s14, 1
      %s144 = scalar_select %p143, %s14, 1
      %s145 = smul.addr %s144, 3
      %s146 = smul.addr %s145, 8
      %s147 = scalar_lea.vmem %s0, %s146
      %p148 = pneg %p35
      %p149 = pneg %p32
      %p150 = pneg %p56
      %p151 = pneg %p53
      %p152 = pneg %p77
      %p153 = pneg %p74
      %p154 = pneg %p103
      %p155 = pneg %p100
      %p156 = scmp.lt.s32.totalorder %s14, 1
      %s157 = scalar_select %p156, %s14, 1
      %s158 = smul.addr %s157, 2
      %s159 = smul.addr %s158, 8
      %s160 = scalar_lea.vmem %s3, %s159
      %p161 = scmp.lt.s32.totalorder %s14, 1
      %s162 = scalar_select %p161, %s14, 1
      %s163 = smul.addr %s162, 3
      %s164 = smul.addr %s163, 8
      %s165 = scalar_lea.vmem %s0, %s164
      %p166 = scmp.lt.s32.totalorder %s14, 1
      %s167 = scalar_select %p166, %s14, 1
      %s168 = smul.addr %s167, 2
      %s169 = smul.addr %s168, 8
      %s170 = scalar_lea.vmem %s3, %s169
      %v171 = vld [vmem:[%s165] sm:$0xff]
      %v172 = vld [vmem:[%s165 + $0x8] sm:$0xff]
      %v173 = vld [vmem:[%s165 + $0x10] sm:$0x3]
      %v174 = vpack.c.bf16 %v171, %v171
      %v175 = vpack.c.bf16 %v172, %v172
      %v176 = vpack.c.bf16 %v173, %v173
      %v177 = vld [vmem:[%s1] sm:$0xf]
      %v178 = vld [vmem:[%s1 + $0x4] sm:$0xf]
      %v179 = vld [vmem:[%s1 + $0x8] sm:$0xf]
      %v180 = vld [vmem:[%s1 + $0xc] sm:$0xf]
      %v181 = vld [vmem:[%s1 + $0x10] sm:$0xf]
      %v182 = vld [vmem:[%s1 + $0x14] sm:$0xf]
      %v183 = vld [vmem:[%s1 + $0x18] sm:$0xf]
      %v184 = vld [vmem:[%s1 + $0x1c] sm:$0xf]
      %v185 = vld [vmem:[%s1 + $0x20] sm:$0xf]
      %v186 = vld [vmem:[%s1 + $0x24] sm:$0xf]
      %v187 = vld [vmem:[%s1 + $0x28] sm:$0xf]
      %v188 = vld [vmem:[%s1 + $0x2c] sm:$0xf]
      %v189 = vld [vmem:[%s1 + $0x30] sm:$0xf]
      %v190 = vld [vmem:[%s1 + $0x34] sm:$0xf]
      %v191 = vld [vmem:[%s1 + $0x38] sm:$0xf]
      %v192 = vld [vmem:[%s1 + $0x3c] sm:$0xf]
      %s193 = scalar_lea.vmem %s1, 64
      %v194 = vld [vmem:[%s193] sm:$0xf]
      %v195 = vld [vmem:[%s193 + $0x4] sm:$0xf]
      %v196 = vld [vmem:[%s193 + $0x8] sm:$0xf]
      %v197 = vld [vmem:[%s193 + $0xc] sm:$0xf]
      %v198 = vld [vmem:[%s193 + $0x10] sm:$0xf]
      %v199 = vld [vmem:[%s193 + $0x14] sm:$0xf]
      %v200 = vld [vmem:[%s193 + $0x18] sm:$0xf]
      %v201 = vld [vmem:[%s193 + $0x1c] sm:$0xf]
      %v202 = vld [vmem:[%s193 + $0x20] sm:$0xf]
      %v203 = vld [vmem:[%s193 + $0x24] sm:$0xf]
      %v204 = vld [vmem:[%s193 + $0x28] sm:$0xf]
      %v205 = vld [vmem:[%s193 + $0x2c] sm:$0xf]
      %v206 = vld [vmem:[%s193 + $0x30] sm:$0xf]
      %v207 = vld [vmem:[%s193 + $0x34] sm:$0xf]
      %v208 = vld [vmem:[%s193 + $0x38] sm:$0xf]
      %v209 = vld [vmem:[%s193 + $0x3c] sm:$0xf]
      %v213 = vunpack.c.l.b16 %v174
      %v214 = vunpack.c.l.b16 %v175
      %v215 = vunpack.c.l.b16 %v176
      %v216 = vpack.c.b16 %v214, %v213
      %v217 = vpack.c.b16 %v215, %v215
      %vm218 = vsmask.f32 7424
      %v220 = vshrl.u32 %v216, 16
      %v222 = vshll.u32 %v216, 16
      %v224 = vrot.slane %v222, 1
      %v225 = vor.u32 %v220, %v224
      %v227 = vshll.u32 %v217, 16
      %v229 = vrot.slane %v227, 1
      %v230 = vsel %vm218, %v225, %v229
      %v248 = vunpack.c.l.b16 %v194
      %v249 = vunpack.c.l.b16 %v195
      %v250 = vunpack.c.l.b16 %v196
      %v251 = vunpack.c.l.b16 %v197
      %v252 = vunpack.c.l.b16 %v198
      %v253 = vunpack.c.l.b16 %v199
      %v254 = vunpack.c.l.b16 %v200
      %v255 = vunpack.c.l.b16 %v201
      %v256 = vunpack.c.l.b16 %v202
      %v257 = vunpack.c.l.b16 %v203
      %v258 = vunpack.c.l.b16 %v204
      %v259 = vunpack.c.l.b16 %v205
      %v260 = vunpack.c.l.b16 %v206
      %v261 = vunpack.c.l.b16 %v207
      %v262 = vunpack.c.l.b16 %v208
      %v263 = vunpack.c.l.b16 %v209
      %v264 = vpack.c.b16 %v249, %v248
      %v265 = vpack.c.b16 %v251, %v250
      %v266 = vpack.c.b16 %v253, %v252
      %v267 = vpack.c.b16 %v255, %v254
      %v268 = vpack.c.b16 %v257, %v256
      %v269 = vpack.c.b16 %v259, %v258
      %v270 = vpack.c.b16 %v261, %v260
      %v271 = vpack.c.b16 %v263, %v262
      %280 = vmatpush.bf16.msra.mxu0 %v271
      %281 = vmatpush.bf16.msra.mxu0 %v270
      %282 = vmatpush.bf16.msra.mxu0 %v269
      %283 = vmatpush.bf16.msra.mxu0 %v268
      %284 = vmatpush.bf16.msra.mxu0 %v267
      %285 = vmatpush.bf16.msra.mxu0 %v266
      %286 = vmatpush.bf16.msra.mxu0 %v265
      %287 = vmatpush.bf16.msra.mxu0 %v264
      %288 = vmatmul.bf16.gmra.mxu0 %v230
      %v289 = vpop.f32.mrf.mxu0
      %v290 = vadd.f32 0.0, %v289
      %v291 = vpop.f32.mrf.mxu0
      %v292 = vadd.f32 0.0, %v291
      %293 = vdwg.mxu0
      %v311 = vunpack.c.l.b16 %v177
      %v312 = vunpack.c.l.b16 %v178
      %v313 = vunpack.c.l.b16 %v179
      %v314 = vunpack.c.l.b16 %v180
      %v315 = vunpack.c.l.b16 %v181
      %v316 = vunpack.c.l.b16 %v182
      %v317 = vunpack.c.l.b16 %v183
      %v318 = vunpack.c.l.b16 %v184
      %v319 = vunpack.c.l.b16 %v185
      %v320 = vunpack.c.l.b16 %v186
      %v321 = vunpack.c.l.b16 %v187
      %v322 = vunpack.c.l.b16 %v188
      %v323 = vunpack.c.l.b16 %v189
      %v324 = vunpack.c.l.b16 %v190
      %v325 = vunpack.c.l.b16 %v191
      %v326 = vunpack.c.l.b16 %v192
      %v327 = vpack.c.b16 %v312, %v311
      %v328 = vpack.c.b16 %v314, %v313
      %v329 = vpack.c.b16 %v316, %v315
      %v330 = vpack.c.b16 %v318, %v317
      %v331 = vpack.c.b16 %v320, %v319
      %v332 = vpack.c.b16 %v322, %v321
      %v333 = vpack.c.b16 %v324, %v323
      %v334 = vpack.c.b16 %v326, %v325
      %343 = vmatpush.bf16.msra.mxu0 %v334
      %344 = vmatpush.bf16.msra.mxu0 %v333
      %345 = vmatpush.bf16.msra.mxu0 %v332
      %346 = vmatpush.bf16.msra.mxu0 %v331
      %347 = vmatpush.bf16.msra.mxu0 %v330
      %348 = vmatpush.bf16.msra.mxu0 %v329
      %349 = vmatpush.bf16.msra.mxu0 %v328
      %350 = vmatpush.bf16.msra.mxu0 %v327
      %351 = vmatmul.bf16.gmra.mxu0 %v216
      %v352 = vpop.f32.mrf.mxu0
      %v353 = vadd.f32 %v290, %v352
      %v354 = vpop.f32.mrf.mxu0
      %v355 = vadd.f32 %v292, %v354
      %356 = vdwg.mxu0
      %s357 = scalar_lea.vmem %s1, 128
      %v358 = vld [vmem:[%s357] sm:$0xf]
      %v359 = vld [vmem:[%s357 + $0x4] sm:$0xf]
      %v360 = vld [vmem:[%s357 + $0x8] sm:$0xf]
      %v361 = vld [vmem:[%s357 + $0xc] sm:$0xf]
      %v362 = vld [vmem:[%s357 + $0x10] sm:$0xf]
      %v363 = vld [vmem:[%s357 + $0x14] sm:$0xf]
      %v364 = vld [vmem:[%s357 + $0x18] sm:$0xf]
      %v365 = vld [vmem:[%s357 + $0x1c] sm:$0xf]
      %v366 = vld [vmem:[%s357 + $0x20] sm:$0xf]
      %v367 = vld [vmem:[%s357 + $0x24] sm:$0xf]
      %v368 = vld [vmem:[%s357 + $0x28] sm:$0xf]
      %v369 = vld [vmem:[%s357 + $0x2c] sm:$0xf]
      %v370 = vld [vmem:[%s357 + $0x30] sm:$0xf]
      %v371 = vld [vmem:[%s357 + $0x34] sm:$0xf]
      %v372 = vld [vmem:[%s357 + $0x38] sm:$0xf]
      %v373 = vld [vmem:[%s357 + $0x3c] sm:$0xf]
      %vm374 = vcmask 1046528
      %v375 = vrot.slane %v216, 1
      %v376 = vrot.slane %v217, 1
      %v377 = vsel %vm374, %v375, %v376
      %v395 = vunpack.c.l.b16 %v358
      %v396 = vunpack.c.l.b16 %v359
      %v397 = vunpack.c.l.b16 %v360
      %v398 = vunpack.c.l.b16 %v361
      %v399 = vunpack.c.l.b16 %v362
      %v400 = vunpack.c.l.b16 %v363
      %v401 = vunpack.c.l.b16 %v364
      %v402 = vunpack.c.l.b16 %v365
      %v403 = vunpack.c.l.b16 %v366
      %v404 = vunpack.c.l.b16 %v367
      %v405 = vunpack.c.l.b16 %v368
      %v406 = vunpack.c.l.b16 %v369
      %v407 = vunpack.c.l.b16 %v370
      %v408 = vunpack.c.l.b16 %v371
      %v409 = vunpack.c.l.b16 %v372
      %v410 = vunpack.c.l.b16 %v373
      %v411 = vpack.c.b16 %v396, %v395
      %v412 = vpack.c.b16 %v398, %v397
      %v413 = vpack.c.b16 %v400, %v399
      %v414 = vpack.c.b16 %v402, %v401
      %v415 = vpack.c.b16 %v404, %v403
      %v416 = vpack.c.b16 %v406, %v405
      %v417 = vpack.c.b16 %v408, %v407
      %v418 = vpack.c.b16 %v410, %v409
      %427 = vmatpush.bf16.msra.mxu0 %v418
      %428 = vmatpush.bf16.msra.mxu0 %v417
      %429 = vmatpush.bf16.msra.mxu0 %v416
      %430 = vmatpush.bf16.msra.mxu0 %v415
      %431 = vmatpush.bf16.msra.mxu0 %v414
      %432 = vmatpush.bf16.msra.mxu0 %v413
      %433 = vmatpush.bf16.msra.mxu0 %v412
      %434 = vmatpush.bf16.msra.mxu0 %v411
      %435 = vmatmul.bf16.gmra.mxu0 %v377
      %v436 = vpop.f32.mrf.mxu0
      %v437 = vadd.f32 0.0, %v436
      %v438 = vpop.f32.mrf.mxu0
      %v439 = vadd.f32 0.0, %v438
      %440 = vdwg.mxu0
      %v441 = vadd.f32 %v353, %v437
      %v442 = vadd.f32 %v355, %v439
      %v443 = vld [vmem:[%s2] sm:$0x1]
      %v444 = vld [vmem:[%s2 + $0x1] sm:$0x1]
      %v445 = vperm.slane %v443, 0
      %v446 = vmul.f32 %v441, %v445
      %v447 = vmul.f32 %v442, %v445
      %v448 = vperm.slane %v444, 0
      %v449 = vadd.f32 %v446, %v448
      %v450 = vadd.f32 %v447, %v448
      %v451 = vmax.f32 %v449, 0.0
      %v452 = vmax.f32 %v450, 0.0
      %453 = vst [vmem:[#allocation2] sm:$0x1] 0.0
      %454 = vst [vmem:[#allocation2 + $0x11] sm:$0x1] 0.0
      %455 = vst [vmem:[#allocation2 + $0x1] sm:$0xff] %v451
      %456 = vst [vmem:[#allocation2 + $0x9] sm:$0xff] %v452
      %v457 = vld [vmem:[#allocation2] sm:$0xff]
      %v458 = vld [vmem:[#allocation2 + $0x8] sm:$0xff]
      %v459 = vpack.c.bf16 %v458, %v457
      %s460 = scalar_lea.vmem %s1, 192
      %v461 = vld [vmem:[%s460] sm:$0xf]
      %v462 = vld [vmem:[%s460 + $0x4] sm:$0xf]
      %v463 = vld [vmem:[%s460 + $0x8] sm:$0xf]
      %v464 = vld [vmem:[%s460 + $0xc] sm:$0xf]
      %v465 = vld [vmem:[%s460 + $0x10] sm:$0xf]
      %v466 = vld [vmem:[%s460 + $0x14] sm:$0xf]
      %v467 = vld [vmem:[%s460 + $0x18] sm:$0xf]
      %v468 = vld [vmem:[%s460 + $0x1c] sm:$0xf]
      %v469 = vld [vmem:[%s460 + $0x20] sm:$0xf]
      %v470 = vld [vmem:[%s460 + $0x24] sm:$0xf]
      %v471 = vld [vmem:[%s460 + $0x28] sm:$0xf]
      %v472 = vld [vmem:[%s460 + $0x2c] sm:$0xf]
      %v473 = vld [vmem:[%s460 + $0x30] sm:$0xf]
      %v474 = vld [vmem:[%s460 + $0x34] sm:$0xf]
      %v475 = vld [vmem:[%s460 + $0x38] sm:$0xf]
      %v476 = vld [vmem:[%s460 + $0x3c] sm:$0xf]
      %v477 = vld [vmem:[#allocation2 + $0x1] sm:$0xff]
      %v478 = vld [vmem:[#allocation2 + $0x9] sm:$0xff]
      %v479 = vpack.c.bf16 %v478, %v477
      %s480 = scalar_lea.vmem %s1, 256
      %v481 = vld [vmem:[%s480] sm:$0xf]
      %v482 = vld [vmem:[%s480 + $0x4] sm:$0xf]
      %v483 = vld [vmem:[%s480 + $0x8] sm:$0xf]
      %v484 = vld [vmem:[%s480 + $0xc] sm:$0xf]
      %v485 = vld [vmem:[%s480 + $0x10] sm:$0xf]
      %v486 = vld [vmem:[%s480 + $0x14] sm:$0xf]
      %v487 = vld [vmem:[%s480 + $0x18] sm:$0xf]
      %v488 = vld [vmem:[%s480 + $0x1c] sm:$0xf]
      %v489 = vld [vmem:[%s480 + $0x20] sm:$0xf]
      %v490 = vld [vmem:[%s480 + $0x24] sm:$0xf]
      %v491 = vld [vmem:[%s480 + $0x28] sm:$0xf]
      %v492 = vld [vmem:[%s480 + $0x2c] sm:$0xf]
      %v493 = vld [vmem:[%s480 + $0x30] sm:$0xf]
      %v494 = vld [vmem:[%s480 + $0x34] sm:$0xf]
      %v495 = vld [vmem:[%s480 + $0x38] sm:$0xf]
      %v496 = vld [vmem:[%s480 + $0x3c] sm:$0xf]
      %v513 = vunpack.c.l.b16 %v481
      %v514 = vunpack.c.l.b16 %v482
      %v515 = vunpack.c.l.b16 %v483
      %v516 = vunpack.c.l.b16 %v484
      %v517 = vunpack.c.l.b16 %v485
      %v518 = vunpack.c.l.b16 %v486
      %v519 = vunpack.c.l.b16 %v487
      %v520 = vunpack.c.l.b16 %v488
      %v521 = vunpack.c.l.b16 %v489
      %v522 = vunpack.c.l.b16 %v490
      %v523 = vunpack.c.l.b16 %v491
      %v524 = vunpack.c.l.b16 %v492
      %v525 = vunpack.c.l.b16 %v493
      %v526 = vunpack.c.l.b16 %v494
      %v527 = vunpack.c.l.b16 %v495
      %v528 = vunpack.c.l.b16 %v496
      %v529 = vpack.c.b16 %v514, %v513
      %v530 = vpack.c.b16 %v516, %v515
      %v531 = vpack.c.b16 %v518, %v517
      %v532 = vpack.c.b16 %v520, %v519
      %v533 = vpack.c.b16 %v522, %v521
      %v534 = vpack.c.b16 %v524, %v523
      %v535 = vpack.c.b16 %v526, %v525
      %v536 = vpack.c.b16 %v528, %v527
      %545 = vmatpush.bf16.msra.mxu0 %v536
      %546 = vmatpush.bf16.msra.mxu0 %v535
      %547 = vmatpush.bf16.msra.mxu0 %v534
      %548 = vmatpush.bf16.msra.mxu0 %v533
      %549 = vmatpush.bf16.msra.mxu0 %v532
      %550 = vmatpush.bf16.msra.mxu0 %v531
      %551 = vmatpush.bf16.msra.mxu0 %v530
      %552 = vmatpush.bf16.msra.mxu0 %v529
      %553 = vmatmul.bf16.gmra.mxu0 %v479
      %v554 = vpop.f32.mrf.mxu0
      %v555 = vadd.f32 0.0, %v554
      %v556 = vpop.f32.mrf.mxu0
      %v557 = vadd.f32 0.0, %v556
      %558 = vdwg.mxu0
      %v575 = vunpack.c.l.b16 %v461
      %v576 = vunpack.c.l.b16 %v462
      %v577 = vunpack.c.l.b16 %v463
      %v578 = vunpack.c.l.b16 %v464
      %v579 = vunpack.c.l.b16 %v465
      %v580 = vunpack.c.l.b16 %v466
      %v581 = vunpack.c.l.b16 %v467
      %v582 = vunpack.c.l.b16 %v468
      %v583 = vunpack.c.l.b16 %v469
      %v584 = vunpack.c.l.b16 %v470
      %v585 = vunpack.c.l.b16 %v471
      %v586 = vunpack.c.l.b16 %v472
      %v587 = vunpack.c.l.b16 %v473
      %v588 = vunpack.c.l.b16 %v474
      %v589 = vunpack.c.l.b16 %v475
      %v590 = vunpack.c.l.b16 %v476
      %v591 = vpack.c.b16 %v576, %v575
      %v592 = vpack.c.b16 %v578, %v577
      %v593 = vpack.c.b16 %v580, %v579
      %v594 = vpack.c.b16 %v582, %v581
      %v595 = vpack.c.b16 %v584, %v583
      %v596 = vpack.c.b16 %v586, %v585
      %v597 = vpack.c.b16 %v588, %v587
      %v598 = vpack.c.b16 %v590, %v589
      %607 = vmatpush.bf16.msra.mxu0 %v598
      %608 = vmatpush.bf16.msra.mxu0 %v597
      %609 = vmatpush.bf16.msra.mxu0 %v596
      %610 = vmatpush.bf16.msra.mxu0 %v595
      %611 = vmatpush.bf16.msra.mxu0 %v594
      %612 = vmatpush.bf16.msra.mxu0 %v593
      %613 = vmatpush.bf16.msra.mxu0 %v592
      %614 = vmatpush.bf16.msra.mxu0 %v591
      %615 = vmatmul.bf16.gmra.mxu0 %v459
      %v616 = vpop.f32.mrf.mxu0
      %v617 = vadd.f32 %v555, %v616
      %v618 = vpop.f32.mrf.mxu0
      %v619 = vadd.f32 %v557, %v618
      %620 = vdwg.mxu0
      %v621 = vld [vmem:[#allocation2 + $0x2] sm:$0xff]
      %v622 = vld [vmem:[#allocation2 + $0xa] sm:$0xff]
      %v623 = vpack.c.bf16 %v622, %v621
      %s624 = scalar_lea.vmem %s1, 320
      %v625 = vld [vmem:[%s624] sm:$0xf]
      %v626 = vld [vmem:[%s624 + $0x4] sm:$0xf]
      %v627 = vld [vmem:[%s624 + $0x8] sm:$0xf]
      %v628 = vld [vmem:[%s624 + $0xc] sm:$0xf]
      %v629 = vld [vmem:[%s624 + $0x10] sm:$0xf]
      %v630 = vld [vmem:[%s624 + $0x14] sm:$0xf]
      %v631 = vld [vmem:[%s624 + $0x18] sm:$0xf]
      %v632 = vld [vmem:[%s624 + $0x1c] sm:$0xf]
      %v633 = vld [vmem:[%s624 + $0x20] sm:$0xf]
      %v634 = vld [vmem:[%s624 + $0x24] sm:$0xf]
      %v635 = vld [vmem:[%s624 + $0x28] sm:$0xf]
      %v636 = vld [vmem:[%s624 + $0x2c] sm:$0xf]
      %v637 = vld [vmem:[%s624 + $0x30] sm:$0xf]
      %v638 = vld [vmem:[%s624 + $0x34] sm:$0xf]
      %v639 = vld [vmem:[%s624 + $0x38] sm:$0xf]
      %v640 = vld [vmem:[%s624 + $0x3c] sm:$0xf]
      %v657 = vunpack.c.l.b16 %v625
      %v658 = vunpack.c.l.b16 %v626
      %v659 = vunpack.c.l.b16 %v627
      %v660 = vunpack.c.l.b16 %v628
      %v661 = vunpack.c.l.b16 %v629
      %v662 = vunpack.c.l.b16 %v630
      %v663 = vunpack.c.l.b16 %v631
      %v664 = vunpack.c.l.b16 %v632
      %v665 = vunpack.c.l.b16 %v633
      %v666 = vunpack.c.l.b16 %v634
      %v667 = vunpack.c.l.b16 %v635
      %v668 = vunpack.c.l.b16 %v636
      %v669 = vunpack.c.l.b16 %v637
      %v670 = vunpack.c.l.b16 %v638
      %v671 = vunpack.c.l.b16 %v639
      %v672 = vunpack.c.l.b16 %v640
      %v673 = vpack.c.b16 %v658, %v657
      %v674 = vpack.c.b16 %v660, %v659
      %v675 = vpack.c.b16 %v662, %v661
      %v676 = vpack.c.b16 %v664, %v663
      %v677 = vpack.c.b16 %v666, %v665
      %v678 = vpack.c.b16 %v668, %v667
      %v679 = vpack.c.b16 %v670, %v669
      %v680 = vpack.c.b16 %v672, %v671
      %689 = vmatpush.bf16.msra.mxu0 %v680
      %690 = vmatpush.bf16.msra.mxu0 %v679
      %691 = vmatpush.bf16.msra.mxu0 %v678
      %692 = vmatpush.bf16.msra.mxu0 %v677
      %693 = vmatpush.bf16.msra.mxu0 %v676
      %694 = vmatpush.bf16.msra.mxu0 %v675
      %695 = vmatpush.bf16.msra.mxu0 %v674
      %696 = vmatpush.bf16.msra.mxu0 %v673
      %697 = vmatmul.bf16.gmra.mxu0 %v623
      %v698 = vpop.f32.mrf.mxu0
      %v699 = vadd.f32 0.0, %v698
      %v700 = vpop.f32.mrf.mxu0
      %v701 = vadd.f32 0.0, %v700
      %702 = vdwg.mxu0
      %v703 = vadd.f32 %v617, %v699
      %v704 = vadd.f32 %v619, %v701
      %v705 = vld [vmem:[%s2 + $0x2] sm:$0x1]
      %v706 = vld [vmem:[%s2 + $0x3] sm:$0x1]
      %v707 = vperm.slane %v705, 0
      %v708 = vmul.f32 %v703, %v707
      %v709 = vmul.f32 %v704, %v707
      %v710 = vperm.slane %v706, 0
      %v711 = vadd.f32 %v708, %v710
      %v712 = vadd.f32 %v709, %v710
      %vm716 = vcmask 1046528
      %v717 = vrot.slane %v171, 1
      %v718 = vrot.slane %v172, 1
      %v719 = vsel %vm716, %v717, %v718
      %v720 = vrot.slane %v173, 1
      %v721 = vsel %vm716, %v718, %v720
      %v724 = vadd.f32 %v711, %v719
      %v725 = vadd.f32 %v712, %v721
      %v726 = vmax.f32 %v724, 0.0
      %v727 = vmax.f32 %v725, 0.0
      %728 = vst [vmem:[%s170] sm:$0xff] %v726
      %729 = vst [vmem:[%s170 + $0x8] sm:$0xff] %v727
      %p730 = scmp.lt.s32.totalorder %s14, 1
      %s731 = scalar_select %p730, %s14, 1
      %s732 = smul.addr %s731, 2
      %s733 = smul.addr %s732, 8
      %s734 = scalar_lea.vmem %s3, %s733
      // Predicated region
      $region33: #{basic_block_pallas.1} parent=31 // pred_check
        %p735 = pneg %p100
      $region34: #{basic_block_pallas.1} parent=31 // pred_check_branch
        %737 = sbr.rel (%p735) target = $region36
      $region35: #{basic_block_pallas.1} parent=31 // pred_region
        _
      $region36: #{basic_block_pallas.1} parent=31 // pred_fallthru
        _
    $region32: #{basic_block_pallas.1} parent=5 // pred_fallthru
      _
    %p738 = scmp.le.s32.totalorder 2, %s9
    // Predicated region
    $region37: #{basic_block_pallas.1} parent=5 // pred_check
      %p739 = pneg %p738
    $region38: #{basic_block_pallas.1} parent=5 // pred_check_branch
      %741 = sbr.rel (%p739) target = $region40
    $region39: #{basic_block_pallas.1} parent=5 // pred_region
      %s742 = ssub.s32 %s9, 2
      // Predicated region
      $region41: #{basic_block_pallas.1} parent=39 // pred_check
        %p743 = pneg %p106
      $region42: #{basic_block_pallas.1} parent=39 // pred_check_branch
        %745 = sbr.rel (%p743) target = $region44
      $region43: #{basic_block_pallas.1} parent=39 // pred_region
        %p746 = scmp.lt.s32.totalorder %s15, 1
        %s747 = scalar_select %p746, %s15, 1
        %s748 = smul.addr %s747, 2
        %s749 = smul.addr %s748, 8
        %s750 = scalar_lea.vmem %s3, %s749
      $region44: #{basic_block_pallas.1} parent=39 // pred_fallthru
        _
    $region40: #{basic_block_pallas.1} parent=5 // pred_fallthru
      _
  $region6: #{basic_block_pallas.1} parent=0 // loop_footer
    %s13 = sadd.s32 1, %s9
  $region7: #{basic_block_pallas.1} parent=0 // loop_footer_branch
    %8 = sbr.rel target = $region3
  $region8: #{basic_block_pallas.1} parent=0 // loop_exit
    _

</llo_original>
